<compile_context>
chip_gen: v6e
topology: v6e:2x2x1
jax: 0.10.0
libtpu: 0.0.40
codegen_flags: <defaults>
</compile_context>

<pallas_src>
import functools

import jax
import jax.numpy as jnp
from jax.experimental import pallas as pl
from jax.experimental.pallas import tpu as pltpu

LANES = 128
MAX_TILE_ROWS = 2048            # 2048 x 128 f32 = 1 MiB/buffer -> 8 MiB double-buffered (v5e-safe).
MIN_ROWS_FOR_SPLIT = 1024       # above this, use >= 2 balanced blocks so both v7x TCs get work.
SMALL_FALLBACK_ELEMS = 1 << 18  # below ~262K elems a fused jnp elementwise op beats a custom call.


def _cdiv(a, b):
    return -(-a // b)


def _round_up(a, b):
    return _cdiv(a, b) * b


def _choose_tile_rows(rows):
    """Single full-array block for small slabs; else an even number of balanced, 16-row-aligned blocks."""
    if rows <= MIN_ROWS_FOR_SPLIT:
        return rows  # block == full array: exempt from (8,128) divisibility; grid=(1,)
    num_blocks = max(2, _cdiv(rows, MAX_TILE_ROWS))
    if num_blocks % 2:
        num_blocks += 1  # even block count -> balanced across v7x's 2 TensorCores
    return _round_up(_cdiv(rows, num_blocks), 16)  # 16-row multiple covers f32 and bf16 layouts


def parametric_log_kernel(x_ref, c1_ref, c2_ref, o_ref):
    # relu(-x) == -(x - |x|) * 0.5 exactly; log1p(y) == log(y + 1).
    x = x_ref[...].astype(jnp.float32)
    c1 = c1_ref[...].astype(jnp.float32)
    c2 = c2_ref[...].astype(jnp.float32)
    pos = jnp.log1p(jax.nn.relu(x + c1))
    neg = jnp.log1p(jax.nn.relu(jax.nn.relu(-x) + c2))
    o_ref[...] = (pos - neg).astype(o_ref.dtype)


def _parametric_log_fused(x, c1, c2):
    # Tiny-shape fallback: one fused XLA elementwise op, no custom-call overhead.
    return jnp.log1p(jax.nn.relu(x + c1)) - jnp.log1p(jax.nn.relu(jax.nn.relu(-x) + c2))


def _parametric_log_pallas(x, c1, c2):
    orig_shape = x.shape
    orig_dtype = x.dtype
    n = x.size

    rows = _cdiv(n, LANES)
    padded_n = rows * LANES

    def to_slab(a):
        flat = a.reshape(-1)
        if padded_n != n:  # only pad when the lane tail is ragged
            flat = jnp.pad(flat, (0, padded_n - n))
        return flat.reshape(rows, LANES)

    x2, c12, c22 = to_slab(x), to_slab(c1), to_slab(c2)

    tile_rows = _choose_tile_rows(rows)
    grid = (_cdiv(rows, tile_rows),)  # ragged final block is masked by Pallas; no row padding
    spec = pl.BlockSpec((tile_rows, LANES), lambda i: (i, 0))

    out2 = pl.pallas_call(
        parametric_log_kernel,
        out_shape=jax.ShapeDtypeStruct((rows, LANES), orig_dtype),
        grid=grid,
        in_specs=[spec, spec, spec],
        out_specs=spec,
        compiler_params=pltpu.CompilerParams(
            dimension_semantics=("parallel",),  # shard grid steps across v7x's 2 TensorCores
        ),
    )(x2, c12, c22)

    out_flat = out2.reshape(-1)
    if padded_n != n:
        out_flat = out_flat[:n]
    return out_flat.reshape(orig_shape)


@functools.partial(jax.jit, static_argnames=("force_pallas",))
def parametric_log(x, c1, c2, force_pallas=False):
    """Elementwise ParametricLog; x, c1, c2 share the same shape (any rank)."""
    if not force_pallas and x.size < SMALL_FALLBACK_ELEMS:
        return _parametric_log_fused(x, c1, c2)
    return _parametric_log_pallas(x, c1, c2)


def parametric_log_ref(x, c1, c2):
    # Literal transcription of the PyTorch forward.
    pos = jnp.log(jax.nn.relu(x + c1) + 1.0)
    neg = -jnp.log(jax.nn.relu(-(x - jnp.abs(x)) * 0.5 + c2) + 1.0)
    return pos + neg


if __name__ == "__main__":
    key = jax.random.PRNGKey(0)

    def make_inputs(shape, k):
        kx, k1, k2 = jax.random.split(k, 3)
        x = jax.random.normal(kx, shape, dtype=jnp.float32)
        c1 = jax.random.normal(k1, shape, dtype=jnp.float32)
        c2 = jax.random.normal(k2, shape, dtype=jnp.float32)
        return x, c1, c2

    k0, k1, k2 = jax.random.split(key, 3)

    # 1) Module-sized demo (NCHW 2x4x16x16): force the Pallas path so the kernel runs.
    x, c1, c2 = make_inputs((2, 4, 16, 16), k0)
    out = jax.block_until_ready(parametric_log(x, c1, c2, force_pallas=True))
    ref = parametric_log_ref(x, c1, c2)
    assert out.shape == x.shape and out.dtype == x.dtype
    assert jnp.allclose(out, ref, atol=1e-6, rtol=1e-5), "pallas path mismatch vs reference"

    # Default dispatch (small-shape fused fallback) must also match.
    out_small = jax.block_until_ready(parametric_log(x, c1, c2))
    assert jnp.allclose(out_small, ref, atol=1e-6, rtol=1e-5), "fallback path mismatch vs reference"

    # 2) Ragged tail: element count not a multiple of 128 (exercises lane-pad path).
    xr, c1r, c2r = make_inputs((3, 5, 17, 19), k1)
    out_r = jax.block_until_ready(parametric_log(xr, c1r, c2r, force_pallas=True))
    assert jnp.allclose(out_r, parametric_log_ref(xr, c1r, c2r), atol=1e-6, rtol=1e-5), "ragged mismatch"

    # 3) Multi-block grid (rows = 2048 -> 2 balanced parallel blocks for v7x).
    xb, c1b, c2b = make_inputs((4, 8, 128, 64), k2)
    out_b = jax.block_until_ready(parametric_log(xb, c1b, c2b, force_pallas=True))
    assert jnp.allclose(out_b, parametric_log_ref(xb, c1b, c2b), atol=1e-6, rtol=1e-5), "multi-block mismatch"

    print("KERNEL_OK")
</pallas_src>

<mosaic_0001>
module attributes {stable_mosaic.version = 11 : i64} {
  func.func @parametric_log_kernel(%arg0: i32, %arg1: memref<16x128xf32, #tpu.memory_space<vmem>>, %arg2: memref<16x128xf32, #tpu.memory_space<vmem>>, %arg3: memref<16x128xf32, #tpu.memory_space<vmem>>, %arg4: memref<16x128xf32, #tpu.memory_space<vmem>>) attributes {dimension_semantics = [#tpu.dimension_semantics<parallel>], iteration_bounds = array<i64: 1>, scalar_prefetch = 0 : i64, scratch_operands = 0 : i64, tpu.core_type = #tpu.core_type<tc>, window_params = [{transform_indices = @transform_0, window_bounds = array<i64: 16, 128>}, {transform_indices = @transform_1, window_bounds = array<i64: 16, 128>}, {transform_indices = @transform_2, window_bounds = array<i64: 16, 128>}, {transform_indices = @transform_3, window_bounds = array<i64: 16, 128>}]} {
    %c0 = arith.constant 0 : index
    %c0_0 = arith.constant 0 : index
    %0 = vector.load %arg1[%c0, %c0_0] : memref<16x128xf32, #tpu.memory_space<vmem>>, vector<16x128xf32>
    %c0_1 = arith.constant 0 : index
    %c0_2 = arith.constant 0 : index
    %1 = vector.load %arg2[%c0_1, %c0_2] : memref<16x128xf32, #tpu.memory_space<vmem>>, vector<16x128xf32>
    %c0_3 = arith.constant 0 : index
    %c0_4 = arith.constant 0 : index
    %2 = vector.load %arg3[%c0_3, %c0_4] : memref<16x128xf32, #tpu.memory_space<vmem>>, vector<16x128xf32>
    %3 = arith.addf %0, %1 : vector<16x128xf32>
    %cst = arith.constant 0.000000e+00 : f32
    %4 = vector.broadcast %cst : f32 to vector<16x128xf32>
    %5 = arith.maximumf %3, %4 : vector<16x128xf32>
    %6 = math.log1p %5 : vector<16x128xf32>
    %cst_5 = arith.constant 0.000000e+00 : f32
    %7 = vector.broadcast %cst_5 : f32 to vector<16x128xf32>
    %8 = arith.subf %7, %0 : vector<16x128xf32>
    %cst_6 = arith.constant 0.000000e+00 : f32
    %9 = vector.broadcast %cst_6 : f32 to vector<16x128xf32>
    %10 = arith.maximumf %8, %9 : vector<16x128xf32>
    %11 = arith.addf %10, %2 : vector<16x128xf32>
    %cst_7 = arith.constant 0.000000e+00 : f32
    %12 = vector.broadcast %cst_7 : f32 to vector<16x128xf32>
    %13 = arith.maximumf %11, %12 : vector<16x128xf32>
    %14 = math.log1p %13 : vector<16x128xf32>
    %15 = arith.subf %6, %14 : vector<16x128xf32>
    %c0_8 = arith.constant 0 : index
    %c0_9 = arith.constant 0 : index
    %16 = vector.load %arg4[%c0_8, %c0_9] : memref<16x128xf32, #tpu.memory_space<vmem>>, vector<16x128xf32>
    tpu.vector_store %arg4[%c0_8, %c0_9], %15 {strides = array<i32>} : memref<16x128xf32, #tpu.memory_space<vmem>>, vector<16x128xf32>,
    return
  }
  func.func @transform_0(%arg0: i32) -> (i32, i32) {
    %c0_i32 = arith.constant 0 : i32
    %c0_i32_0 = arith.constant 0 : i32
    return %arg0, %c0_i32 : i32, i32
  }
  func.func @transform_1(%arg0: i32) -> (i32, i32) {
    %c0_i32 = arith.constant 0 : i32
    %c0_i32_0 = arith.constant 0 : i32
    return %arg0, %c0_i32 : i32, i32
  }
  func.func @transform_2(%arg0: i32) -> (i32, i32) {
    %c0_i32 = arith.constant 0 : i32
    %c0_i32_0 = arith.constant 0 : i32
    return %arg0, %c0_i32 : i32, i32
  }
  func.func @transform_3(%arg0: i32) -> (i32, i32) {
    %c0_i32 = arith.constant 0 : i32
    %c0_i32_0 = arith.constant 0 : i32
    return %arg0, %c0_i32 : i32, i32
  }
}

</mosaic_0001>

<llo_original>
// kernel: parametric_log.1
$region0: #{parametric_log.1}
  #allocation0 [shape = 'u32[]', space=smem, size = 0x4, offset = 0x4, fixed_abs, tag = 'smem constant byte address 0x4 - core index']
  #allocation1 [shape = 'u32[144,128]{1,0:T(1,128)}', space=vmem, size = 0x12000, scoped, tag = 'internal scratch']
  %s0 = inlined_call_operand.vmem [shape: f32[16,128], index: 0, kind: input, shape index: {}]
  %s1 = inlined_call_operand.vmem [shape: f32[16,128], index: 1, kind: input, shape index: {}]
  %s2 = inlined_call_operand.vmem [shape: f32[16,128], index: 2, kind: input, shape index: {}]
  %s3 = inlined_call_operand.vmem [shape: f32[16,128], index: 3, kind: output, shape index: {}]
  %s4 = sld [smem:[#allocation0]]
  $region22: #{parametric_log.1} parent=0
    _
  %s6 = ssub.s32 1, %s4
  %s7 = scalar_select 0, %s6, %s4
  // Predicated region
  $region2: #{parametric_log.1} parent=0 // pred_check
    _
  $region3: #{parametric_log.1} parent=0 // pred_check_branch
    %9 = sbr.rel (0) target = $region5
  $region4: #{parametric_log.1} parent=0 // pred_region
    _
  $region5: #{parametric_log.1} parent=0 // pred_fallthru
    _
  // Predicated region
  $region6: #{parametric_log.1} parent=0 // pred_check
    _
  $region7: #{parametric_log.1} parent=0 // pred_check_branch
    %11 = sbr.rel (0) target = $region9
  $region8: #{parametric_log.1} parent=0 // pred_region
    _
  $region9: #{parametric_log.1} parent=0 // pred_fallthru
    _
  // Predicated region
  $region10: #{parametric_log.1} parent=0 // pred_check
    _
  $region11: #{parametric_log.1} parent=0 // pred_check_branch
    %13 = sbr.rel (0) target = $region13
  $region12: #{parametric_log.1} parent=0 // pred_region
    _
  $region13: #{parametric_log.1} parent=0 // pred_fallthru
    _
  %v14 = vld [vmem:[%s0] sm:$0xff]
  %v15 = vld [vmem:[%s0 + $0x8] sm:$0xff]
  %v16 = vld [vmem:[%s1] sm:$0xff]
  %v17 = vld [vmem:[%s1 + $0x8] sm:$0xff]
  %v18 = vld [vmem:[%s2] sm:$0xff]
  %v19 = vld [vmem:[%s2 + $0x8] sm:$0xff]
  %v20 = vadd.f32 %v14, %v16
  %v21 = vadd.f32 %v15, %v17
  %v22 = vmax.f32 %v20, 0.0
  %v23 = vmax.f32 %v21, 0.0
  %v24 = vadd.f32 %v22, 1.0
  %v25 = vlog2.pop %v24
  %v26 = vmul.f32 %v25, 0.6931472
  %v27 = vmul.f32 -0.5, %v22
  %v28 = vadd.f32 %v27, 1.0
  %v29 = vmul.f32 %v28, %v22
  %v30 = vand.u32 2147483647, %v22
  %vm31 = vcmp.lt.f32.partialorder %v30, 0.0004427343
  %v32 = vsel %vm31, %v29, %v26
  %v33 = vadd.f32 %v23, 1.0
  %v34 = vlog2.pop %v33
  %v35 = vmul.f32 %v34, 0.6931472
  %v36 = vmul.f32 -0.5, %v23
  %v37 = vadd.f32 %v36, 1.0
  %v38 = vmul.f32 %v37, %v23
  %v39 = vand.u32 2147483647, %v23
  %vm40 = vcmp.lt.f32.partialorder %v39, 0.0004427343
  %v41 = vsel %vm40, %v38, %v35
  %v42 = vsub.f32 0.0, %v14
  %v43 = vsub.f32 0.0, %v15
  %v44 = vmax.f32 %v42, 0.0
  %v45 = vmax.f32 %v43, 0.0
  %v46 = vadd.f32 %v44, %v18
  %v47 = vadd.f32 %v45, %v19
  %v48 = vmax.f32 %v46, 0.0
  %v49 = vmax.f32 %v47, 0.0
  %v50 = vadd.f32 %v48, 1.0
  %v51 = vlog2.pop %v50
  %v52 = vmul.f32 %v51, 0.6931472
  %v53 = vmul.f32 -0.5, %v48
  %v54 = vadd.f32 %v53, 1.0
  %v55 = vmul.f32 %v54, %v48
  %v56 = vand.u32 2147483647, %v48
  %vm57 = vcmp.lt.f32.partialorder %v56, 0.0004427343
  %v58 = vsel %vm57, %v55, %v52
  %v59 = vadd.f32 %v49, 1.0
  %v60 = vlog2.pop %v59
  %v61 = vmul.f32 %v60, 0.6931472
  %v62 = vmul.f32 -0.5, %v49
  %v63 = vadd.f32 %v62, 1.0
  %v64 = vmul.f32 %v63, %v49
  %v65 = vand.u32 2147483647, %v49
  %vm66 = vcmp.lt.f32.partialorder %v65, 0.0004427343
  %v67 = vsel %vm66, %v64, %v61
  %v68 = vsub.f32 %v32, %v58
  %v69 = vsub.f32 %v41, %v67
  %70 = vst [vmem:[%s3] sm:$0xff] %v68
  %71 = vst [vmem:[%s3 + $0x8] sm:$0xff] %v69
  // Predicated region
  $region14: #{parametric_log.1} parent=0 // pred_check
    _
  $region15: #{parametric_log.1} parent=0 // pred_check_branch
    %73 = sbr.rel (0) target = $region17
  $region16: #{parametric_log.1} parent=0 // pred_region
    _
  $region17: #{parametric_log.1} parent=0 // pred_fallthru
    _
  // Predicated region
  $region18: #{parametric_log.1} parent=0 // pred_check
    _
  $region19: #{parametric_log.1} parent=0 // pred_check_branch
    %75 = sbr.rel (0) target = $region21
  $region20: #{parametric_log.1} parent=0 // pred_region
    _
  $region21: #{parametric_log.1} parent=0 // pred_fallthru
    _

</llo_original>
